<compile_context>
chip_gen: v6e
topology: v6e:2x2x1
jax: 0.10.0
libtpu: 0.0.40
codegen_flags: <defaults>
</compile_context>

<pallas_src>
import jax
import jax.numpy as jnp
from jax.experimental import pallas as pl
from jax.experimental.pallas import tpu as pltpu


def _conv_block_kernel(lhs1_ref, w1_ref, t1_ref, w2_ref, t2_ref, o_ref, a1p_ref):
    # lhs1_ref: (1, H, K1p)          bf16  height-im2col'd, width-padded input rows
    # w1_ref  : (K1p, W*Cout)        bf16  stage-1 block-banded folded weights
    # t1_ref  : (1, W*Cout)          f32   folded shift (bias*scale + shift), tiled over W
    # w2_ref  : (3, W*Cout, W*Cout)  bf16  stage-2 per-dy banded folded weights
    # t2_ref  : (1, W*Cout)          f32
    # o_ref   : (1, H, W*Cout)       f32   lane-dense output block
    # a1p_ref : (H+2, W*Cout)        f32   scratch: stage-1 act. with zero top/bottom rows
    H = o_ref.shape[1]
    WC = o_ref.shape[2]

    # ---- stage 1: one MXU matmul filling all W*Cout (=128) output lanes ----
    y1 = jnp.dot(lhs1_ref[0], w1_ref[...], preferred_element_type=jnp.float32)
    y1 = jnp.maximum(y1 + t1_ref[...], 0.0)                   # (H, WC) f32

    # Lane-dense scratch: only the two 1-row dy borders need zeros (the dx/width
    # zero-padding is already encoded in the banded stage-2 weights).
    a1p_ref[0:1, :] = jnp.zeros((1, WC), jnp.float32)
    a1p_ref[H + 1:H + 2, :] = jnp.zeros((1, WC), jnp.float32)
    a1p_ref[1:H + 1, :] = y1

    # ---- stage 2: three dy-shifted matmuls against banded weights ----
    y2 = jnp.dot(a1p_ref[0:H, :].astype(jnp.bfloat16), w2_ref[0],
                 preferred_element_type=jnp.float32)
    y2 += jnp.dot(y1.astype(jnp.bfloat16), w2_ref[1],          # dy=1 slice == y1
                  preferred_element_type=jnp.float32)
    y2 += jnp.dot(a1p_ref[2:H + 2, :].astype(jnp.bfloat16), w2_ref[2],
                  preferred_element_type=jnp.float32)
    y2 = jnp.maximum(y2 + t2_ref[...], 0.0)

    o_ref[0] = y2.astype(o_ref.dtype)                          # full-lane store


def _band_weight(w_hwio, W, lhs_pad):
    """Block-banded (Toeplitz) weight so a 3x3 conv becomes matmuls whose output
    dimension is W*Cout (lane-dense). Row index = (dy*Wrow + width_pos)*Cin + ci,
    column index = w*Cout + co.
      lhs_pad=1: LHS rows already carry left/right zero columns (pre-padded input).
      lhs_pad=0: LHS rows are unpadded; width borders come from omitted bands."""
    Cin, Cout = w_hwio.shape[2], w_hwio.shape[3]
    Wrow = W + 2 * lhs_pad
    dy, dx, w, ci, co = jnp.meshgrid(jnp.arange(3), jnp.arange(3), jnp.arange(W),
                                     jnp.arange(Cin), jnp.arange(Cout), indexing="ij")
    src = w + dx - (1 - lhs_pad)                  # width position inside an LHS row
    rows = (dy * Wrow + src) * Cin + ci
    cols = w * Cout + co
    vals = w_hwio[dy, dx, ci, co]
    valid = (src >= 0) & (src < Wrow)
    rows = jnp.where(valid, rows, 0)
    vals = jnp.where(valid, vals, 0.0)            # out-of-range taps contribute zero
    out = jnp.zeros((3 * Wrow * Cin, W * Cout), jnp.float32)
    return out.at[rows.reshape(-1), cols.reshape(-1)].add(vals.reshape(-1))


def conv_block_forward(x_nchw, params):
    """Pallas forward pass. Input/output are NCHW float32 (PyTorch convention)."""
    w1, b1, s1, t1, w2, b2, s2, t2 = params
    x = jnp.transpose(x_nchw, (0, 2, 3, 1)).astype(jnp.float32)   # NHWC
    N, H, W, Cin = x.shape
    Cout = w1.shape[-1]
    WC = W * Cout

    # ---- host-side folding: BN(conv(x,w)+b) == conv(x, w*s) + (b*s + t) ----
    w1s = w1 * s1.reshape(1, 1, 1, Cout)
    w2s = w2 * s2.reshape(1, 1, 1, Cout)
    t1f = jnp.tile(b1.reshape(1, Cout) * s1.reshape(1, Cout) + t1.reshape(1, Cout),
                   (1, W)).astype(jnp.float32)                    # (1, WC)
    t2f = jnp.tile(b2.reshape(1, Cout) * s2.reshape(1, Cout) + t2.reshape(1, Cout),
                   (1, W)).astype(jnp.float32)

    # ---- banded bf16 weights (built once, at trace time) ----
    K1 = 3 * (W + 2) * Cin
    K1p = ((K1 + 15) // 16) * 16                  # pad K to bf16 sublane pack
    w1b = _band_weight(w1s, W, lhs_pad=1)                          # (K1, WC)
    w1b = jnp.pad(w1b, ((0, K1p - K1), (0, 0))).astype(jnp.bfloat16)
    w2b = _band_weight(w2s, W, lhs_pad=0).reshape(3, WC, WC).astype(jnp.bfloat16)

    # ---- stage-1 LHS: spatial pad + height-only im2col + bf16, built in XLA ----
    xp = jnp.pad(x, ((0, 0), (1, 1), (1, 1), (0, 0)))              # (N, H+2, W+2, Cin)
    xr = xp.reshape(N, H + 2, (W + 2) * Cin)
    lhs1 = jnp.concatenate([xr[:, dy:dy + H, :] for dy in range(3)], axis=-1)
    lhs1 = jnp.pad(lhs1, ((0, 0), (0, 0), (0, K1p - K1))).astype(jnp.bfloat16)

    def wspec(a):
        return pl.BlockSpec(a.shape, lambda n: (0,) * a.ndim)

    flops = 2 * N * H * W * 9 * (Cin * Cout + Cout * Cout)
    bytes_accessed = (lhs1.size * 2 + (w1b.size + w2b.size) * 2
                      + (t1f.size + t2f.size) * 4 + N * H * WC * 4)

    # Scoped-VMEM budget from the actual blocks; clamp to 32 MiB so it is sane on
    # v7x (64 MiB VMEM/TC). Actual need here is well under 1 MiB.
    in_blk = H * K1p * 2
    out_blk = H * WC * 4
    wt_bytes = (w1b.size + w2b.size) * 2 + (t1f.size + t2f.size) * 4
    scratch_bytes = (H + 2) * WC * 4
    vmem_limit = int(min(4 * (2 * in_blk + 2 * out_blk + wt_bytes + scratch_bytes)
                         + (2 << 20), 32 << 20))

    out_flat = pl.pallas_call(
        _conv_block_kernel,
        out_shape=jax.ShapeDtypeStruct((N, H, WC), jnp.float32),
        grid=(N,),
        in_specs=[
            pl.BlockSpec((1, H, K1p), lambda n: (n, 0, 0)),   # per-image LHS slab
            wspec(w1b),   # stage-1 banded weights (K1p, WC) bf16
            wspec(t1f),   # stage-1 folded shift   (1, WC)   f32
            wspec(w2b),   # stage-2 banded weights (3, WC, WC) bf16
            wspec(t2f),   # stage-2 folded shift   (1, WC)   f32
        ],
        out_specs=pl.BlockSpec((1, H, WC), lambda n: (n, 0, 0)),
        scratch_shapes=[pltpu.VMEM((H + 2, WC), jnp.float32)],
        compiler_params=pltpu.CompilerParams(
            dimension_semantics=("parallel",),    # >=2 steps keeps both v7x TCs busy
            vmem_limit_bytes=vmem_limit),
        cost_estimate=pl.CostEstimate(flops=flops, transcendentals=0,
                                      bytes_accessed=bytes_accessed),
    )(lhs1, w1b, t1f, w2b, t2f)

    out = out_flat.reshape(N, H, W, Cout)
    return jnp.transpose(out, (0, 3, 1, 2))                       # back to NCHW


def make_params(key, ch_in, ch_out, eps=1e-5):
    """Deterministic synthetic parameters matching conv_block(ch_in, ch_out)."""
    ks = jax.random.split(key, 12)

    def conv_w(k, ci, co):
        # PyTorch layout is (co, ci, 3, 3); generate then move to HWIO (3,3,ci,co).
        fan_in = ci * 9
        bound = 1.0 / jnp.sqrt(fan_in)
        w_oihw = jax.random.uniform(k, (co, ci, 3, 3), jnp.float32, -bound, bound)
        return jnp.transpose(w_oihw, (2, 3, 1, 0))

    def conv_b(k, ci, co):
        bound = 1.0 / jnp.sqrt(ci * 9)
        return jax.random.uniform(k, (1, co), jnp.float32, -bound, bound)

    def bn(k_g, k_b, k_m, k_v, co):
        gamma = 1.0 + 0.1 * jax.random.normal(k_g, (co,), jnp.float32)
        beta = 0.1 * jax.random.normal(k_b, (co,), jnp.float32)
        mean = 0.1 * jax.random.normal(k_m, (co,), jnp.float32)
        var = jax.nn.softplus(jax.random.normal(k_v, (co,), jnp.float32)) + 0.5
        scale = gamma / jnp.sqrt(var + eps)
        shift = beta - mean * scale
        return scale.reshape(1, co), shift.reshape(1, co)

    w1 = conv_w(ks[0], ch_in, ch_out)
    b1 = conv_b(ks[1], ch_in, ch_out)
    s1, t1 = bn(ks[2], ks[3], ks[4], ks[5], ch_out)
    w2 = conv_w(ks[6], ch_out, ch_out)
    b2 = conv_b(ks[7], ch_out, ch_out)
    s2, t2 = bn(ks[8], ks[9], ks[10], ks[11], ch_out)
    return (w1, b1, s1, t1, w2, b2, s2, t2)


def reference_forward(x_nchw, params):
    """Plain-JAX f32 reference (lax.conv) used only to validate the kernel."""
    w1, b1, s1, t1, w2, b2, s2, t2 = params
    x = jnp.transpose(x_nchw, (0, 2, 3, 1)).astype(jnp.float32)

    def stage(x, w, b, s, t):
        y = jax.lax.conv_general_dilated(
            x, w, window_strides=(1, 1), padding="SAME",
            dimension_numbers=("NHWC", "HWIO", "NHWC"))
        y = y + b.reshape(1, 1, 1, -1)
        y = y * s.reshape(1, 1, 1, -1) + t.reshape(1, 1, 1, -1)
        return jnp.maximum(y, 0.0)

    y = stage(x, w1, b1, s1, t1)
    y = stage(y, w2, b2, s2, t2)
    return jnp.transpose(y, (0, 3, 1, 2))


if __name__ == "__main__":
    N, CH_IN, CH_OUT, H, W = 2, 4, 8, 16, 16

    key = jax.random.PRNGKey(0)
    k_x, k_p = jax.random.split(key)
    x = jax.random.normal(k_x, (N, CH_IN, H, W), jnp.float32)
    params = make_params(k_p, CH_IN, CH_OUT)

    out = jax.jit(conv_block_forward)(x, params)
    out = jax.block_until_ready(out)

    ref = reference_forward(x, params)
    assert out.shape == (N, CH_OUT, H, W), out.shape
    # bf16 MXU operands (f32 accumulation) -> slightly looser tolerance than pure f32.
    max_err = float(jnp.max(jnp.abs(out - ref)))
    assert max_err < 5e-2, max_err

    print("KERNEL_OK")
</pallas_src>

<mosaic_0001>
module attributes {stable_mosaic.version = 11 : i64} {
  func.func private @main(%arg0: i32) attributes {dimension_semantics = [#tpu.dimension_semantics<core_parallel>], iteration_bounds = array<i64: 2>, tpu.core_type = #tpu.core_type<sc_scalar_subcore>, window_params = []} {
    return
  }
}

module attributes {stable_mosaic.version = 11 : i64} {
  func.func private @main(%arg0: i32) attributes {dimension_semantics = [#tpu.dimension_semantics<core_parallel>], iteration_bounds = array<i64: 2>, tpu.core_type = #tpu.core_type<sc_scalar_subcore>, window_params = []} {
    return
  }
}

module attributes {stable_mosaic.version = 11 : i64} {
  func.func @_conv_block_kernel(%arg0: i32, %arg1: memref<1x16x224xbf16, #tpu.memory_space<vmem>>, %arg2: memref<224x128xbf16, #tpu.memory_space<vmem>>, %arg3: memref<1x128xf32, #tpu.memory_space<vmem>>, %arg4: memref<3x128x128xbf16, #tpu.memory_space<vmem>>, %arg5: memref<1x128xf32, #tpu.memory_space<vmem>>, %arg6: memref<1x16x128xf32, #tpu.memory_space<vmem>>, %arg7: memref<18x128xf32, #tpu.memory_space<vmem>>) attributes {dimension_semantics = [#tpu.dimension_semantics<parallel>], iteration_bounds = array<i64: 2>, scalar_prefetch = 0 : i64, scratch_operands = 1 : i64, tpu.core_type = #tpu.core_type<tc>, window_params = [{transform_indices = @transform_0, window_bounds = array<i64: 1, 16, 224>}, {pipeline_mode = #tpu.pipeline_mode<synchronous>, transform_indices = @transform_1, window_bounds = array<i64: 224, 128>}, {pipeline_mode = #tpu.pipeline_mode<synchronous>, transform_indices = @transform_2, window_bounds = array<i64: 1, 128>}, {pipeline_mode = #tpu.pipeline_mode<synchronous>, transform_indices = @transform_3, window_bounds = array<i64: 3, 128, 128>}, {pipeline_mode = #tpu.pipeline_mode<synchronous>, transform_indices = @transform_4, window_bounds = array<i64: 1, 128>}, {transform_indices = @transform_5, window_bounds = array<i64: 1, 16, 128>}]} {
    %c0 = arith.constant 0 : index
    %c0_0 = arith.constant 0 : index
    %c0_1 = arith.constant 0 : index
    %0 = vector.load %arg1[%c0, %c0_0, %c0_1] : memref<1x16x224xbf16, #tpu.memory_space<vmem>>, vector<1x16x224xbf16>
    %1 = vector.shape_cast %0 : vector<1x16x224xbf16> to vector<16x224xbf16>
    %c0_2 = arith.constant 0 : index
    %c0_3 = arith.constant 0 : index
    %2 = vector.load %arg2[%c0_2, %c0_3] : memref<224x128xbf16, #tpu.memory_space<vmem>>, vector<224x128xbf16>
    %cst = arith.constant dense<0.000000e+00> : vector<16x128xf32>
    %3 = tpu.matmul %1, %2, %cst {dimension_numbers = #tpu.dot_dimension_numbers<[1], [0], [0], [1], [0, 0, 1, 1], [], []>} : vector<16x224xbf16>, vector<224x128xbf16>, vector<16x128xf32> -> vector<16x128xf32>
    %c0_4 = arith.constant 0 : index
    %c0_5 = arith.constant 0 : index
    %4 = vector.load %arg3[%c0_4, %c0_5] : memref<1x128xf32, #tpu.memory_space<vmem>>, vector<1x128xf32>
    %5 = vector.broadcast %4 : vector<1x128xf32> to vector<16x128xf32>
    %6 = arith.addf %3, %5 : vector<16x128xf32>
    %cst_6 = arith.constant 0.000000e+00 : f32
    %7 = vector.broadcast %cst_6 : f32 to vector<16x128xf32>
    %8 = arith.maximumf %6, %7 : vector<16x128xf32>
    %cst_7 = arith.constant 0.000000e+00 : f32
    %9 = vector.broadcast %cst_7 : f32 to vector<1x128xf32>
    %c0_8 = arith.constant 0 : index
    %c0_9 = arith.constant 0 : index
    %10 = vector.load %arg7[%c0_8, %c0_9] : memref<18x128xf32, #tpu.memory_space<vmem>>, vector<1x128xf32>
    tpu.vector_store %arg7[%c0_8, %c0_9], %9 {strides = array<i32>} : memref<18x128xf32, #tpu.memory_space<vmem>>, vector<1x128xf32>,
    %cst_10 = arith.constant 0.000000e+00 : f32
    %11 = vector.broadcast %cst_10 : f32 to vector<1x128xf32>
    %c17 = arith.constant 17 : index
    %c0_11 = arith.constant 0 : index
    %12 = vector.load %arg7[%c17, %c0_11] : memref<18x128xf32, #tpu.memory_space<vmem>>, vector<1x128xf32>
    tpu.vector_store %arg7[%c17, %c0_11], %11 {strides = array<i32>} : memref<18x128xf32, #tpu.memory_space<vmem>>, vector<1x128xf32>,
    %c1 = arith.constant 1 : index
    %c0_12 = arith.constant 0 : index
    %13 = vector.load %arg7[%c1, %c0_12] : memref<18x128xf32, #tpu.memory_space<vmem>>, vector<16x128xf32>
    tpu.vector_store %arg7[%c1, %c0_12], %8 {strides = array<i32>} : memref<18x128xf32, #tpu.memory_space<vmem>>, vector<16x128xf32>,
    %c0_13 = arith.constant 0 : index
    %c0_14 = arith.constant 0 : index
    %14 = vector.load %arg7[%c0_13, %c0_14] : memref<18x128xf32, #tpu.memory_space<vmem>>, vector<16x128xf32>
    %15 = arith.truncf %14 : vector<16x128xf32> to vector<16x128xbf16>
    %c0_15 = arith.constant 0 : index
    %c0_16 = arith.constant 0 : index
    %c0_17 = arith.constant 0 : index
    %16 = vector.load %arg4[%c0_15, %c0_16, %c0_17] : memref<3x128x128xbf16, #tpu.memory_space<vmem>>, vector<1x128x128xbf16>
    %17 = vector.shape_cast %16 : vector<1x128x128xbf16> to vector<128x128xbf16>
    %cst_18 = arith.constant dense<0.000000e+00> : vector<16x128xf32>
    %18 = tpu.matmul %15, %17, %cst_18 {dimension_numbers = #tpu.dot_dimension_numbers<[1], [0], [0], [1], [0, 0, 1, 1], [], []>} : vector<16x128xbf16>, vector<128x128xbf16>, vector<16x128xf32> -> vector<16x128xf32>
    %19 = arith.truncf %8 : vector<16x128xf32> to vector<16x128xbf16>
    %c1_19 = arith.constant 1 : index
    %c0_20 = arith.constant 0 : index
    %c0_21 = arith.constant 0 : index
    %20 = vector.load %arg4[%c1_19, %c0_20, %c0_21] : memref<3x128x128xbf16, #tpu.memory_space<vmem>>, vector<1x128x128xbf16>
    %21 = vector.shape_cast %20 : vector<1x128x128xbf16> to vector<128x128xbf16>
    %cst_22 = arith.constant dense<0.000000e+00> : vector<16x128xf32>
    %22 = tpu.matmul %19, %21, %cst_22 {dimension_numbers = #tpu.dot_dimension_numbers<[1], [0], [0], [1], [0, 0, 1, 1], [], []>} : vector<16x128xbf16>, vector<128x128xbf16>, vector<16x128xf32> -> vector<16x128xf32>
    %23 = arith.addf %18, %22 : vector<16x128xf32>
    %c2 = arith.constant 2 : index
    %c0_23 = arith.constant 0 : index
    %24 = vector.load %arg7[%c2, %c0_23] : memref<18x128xf32, #tpu.memory_space<vmem>>, vector<16x128xf32>
    %25 = arith.truncf %24 : vector<16x128xf32> to vector<16x128xbf16>
    %c2_24 = arith.constant 2 : index
    %c0_25 = arith.constant 0 : index
    %c0_26 = arith.constant 0 : index
    %26 = vector.load %arg4[%c2_24, %c0_25, %c0_26] : memref<3x128x128xbf16, #tpu.memory_space<vmem>>, vector<1x128x128xbf16>
    %27 = vector.shape_cast %26 : vector<1x128x128xbf16> to vector<128x128xbf16>
    %cst_27 = arith.constant dense<0.000000e+00> : vector<16x128xf32>
    %28 = tpu.matmul %25, %27, %cst_27 {dimension_numbers = #tpu.dot_dimension_numbers<[1], [0], [0], [1], [0, 0, 1, 1], [], []>} : vector<16x128xbf16>, vector<128x128xbf16>, vector<16x128xf32> -> vector<16x128xf32>
    %29 = arith.addf %23, %28 : vector<16x128xf32>
    %c0_28 = arith.constant 0 : index
    %c0_29 = arith.constant 0 : index
    %30 = vector.load %arg5[%c0_28, %c0_29] : memref<1x128xf32, #tpu.memory_space<vmem>>, vector<1x128xf32>
    %31 = vector.broadcast %30 : vector<1x128xf32> to vector<16x128xf32>
    %32 = arith.addf %29, %31 : vector<16x128xf32>
    %cst_30 = arith.constant 0.000000e+00 : f32
    %33 = vector.broadcast %cst_30 : f32 to vector<16x128xf32>
    %34 = arith.maximumf %32, %33 : vector<16x128xf32>
    %c0_31 = arith.constant 0 : index
    %c0_32 = arith.constant 0 : index
    %c0_33 = arith.constant 0 : index
    %35 = vector.load %arg6[%c0_31, %c0_32, %c0_33] : memref<1x16x128xf32, #tpu.memory_space<vmem>>, vector<1x16x128xf32>
    %36 = vector.shape_cast %35 : vector<1x16x128xf32> to vector<16x128xf32>
    %37 = vector.shape_cast %34 : vector<16x128xf32> to vector<1x16x128xf32>
    tpu.vector_store %arg6[%c0_31, %c0_32, %c0_33], %37 {strides = array<i32>} : memref<1x16x128xf32, #tpu.memory_space<vmem>>, vector<1x16x128xf32>,
    return
  }
  func.func @transform_0(%arg0: i32) -> (i32, i32, i32) {
    %c0_i32 = arith.constant 0 : i32
    %c0_i32_0 = arith.constant 0 : i32
    %c0_i32_1 = arith.constant 0 : i32
    return %arg0, %c0_i32, %c0_i32_0 : i32, i32, i32
  }
  func.func @transform_1(%arg0: i32) -> (i32, i32) {
    %c0_i32 = arith.constant 0 : i32
    %c0_i32_0 = arith.constant 0 : i32
    %c0_i32_1 = arith.constant 0 : i32
    return %c0_i32, %c0_i32_0 : i32, i32
  }
  func.func @transform_2(%arg0: i32) -> (i32, i32) {
    %c0_i32 = arith.constant 0 : i32
    %c0_i32_0 = arith.constant 0 : i32
    %c0_i32_1 = arith.constant 0 : i32
    return %c0_i32, %c0_i32_0 : i32, i32
  }
  func.func @transform_3(%arg0: i32) -> (i32, i32, i32) {
    %c0_i32 = arith.constant 0 : i32
    %c0_i32_0 = arith.constant 0 : i32
    %c0_i32_1 = arith.constant 0 : i32
    %c0_i32_2 = arith.constant 0 : i32
    return %c0_i32, %c0_i32_0, %c0_i32_1 : i32, i32, i32
  }
  func.func @transform_4(%arg0: i32) -> (i32, i32) {
    %c0_i32 = arith.constant 0 : i32
    %c0_i32_0 = arith.constant 0 : i32
    %c0_i32_1 = arith.constant 0 : i32
    return %c0_i32, %c0_i32_0 : i32, i32
  }
  func.func @transform_5(%arg0: i32) -> (i32, i32, i32) {
    %c0_i32 = arith.constant 0 : i32
    %c0_i32_0 = arith.constant 0 : i32
    %c0_i32_1 = arith.constant 0 : i32
    return %arg0, %c0_i32, %c0_i32_0 : i32, i32, i32
  }
}

</mosaic_0001>

<llo_original>
// kernel: conv_block_forward.1
$region0: #{conv_block_forward.1}
  #allocation0 [shape = 'u32[]', space=smem, size = 0x4, offset = 0x4, fixed_abs, tag = 'smem constant byte address 0x4 - core index']
  #allocation1 [shape = 'u32[144,128]{1,0:T(1,128)}', space=vmem, size = 0x12000, scoped, tag = 'internal scratch']
  #allocation2 [shape = 'f32[18,128]{1,0:T(8,128)}', space=vmem, size = 0x3000, scoped, tag = 'scratch operand']
  %s0 = inlined_call_operand.vmem [shape: bf16[2,16,224], index: 0, kind: input, shape index: {}]
  %s1 = inlined_call_operand.vmem [shape: bf16[224,128], index: 1, kind: input, shape index: {}]
  %s2 = inlined_call_operand.vmem [shape: f32[1,128], index: 2, kind: input, shape index: {}]
  %s3 = inlined_call_operand.vmem [shape: bf16[3,128,128], index: 3, kind: input, shape index: {}]
  %s4 = inlined_call_operand.vmem [shape: f32[1,128], index: 4, kind: input, shape index: {}]
  %s5 = inlined_call_operand.vmem [shape: f32[2,16,128], index: 5, kind: output, shape index: {}]
  %s6 = sld [smem:[#allocation0]]
  $region53: #{conv_block_forward.1} parent=0
    _
  %s8 = ssub.s32 1, %s6
  %s9 = scalar_select 0, %s8, %s6
  loop: start=0, step=1, limit=4
  $region2: #{conv_block_forward.1} parent=0 // loop_pre_header
    _
  $region3: #{conv_block_forward.1} parent=0 // loop_header
    %s11 = sphi 0, %s15
    %p12 = scmp.ge.s32.totalorder %s11, 4
    %s21 = sphi 0, %s23
    %s24 = sphi 0, %s21
    %s25 = sphi 0, %s24
    %s41 = sphi 0, %s25
    %s45 = sphi 0, %s45
    %s47 = sphi 0, %s45
    %s48 = sphi 0, %s47
    %s62 = sphi 0, %s48
    %s66 = sphi 0, %s66
    %s68 = sphi 0, %s66
    %s69 = sphi 0, %s68
    %s83 = sphi 0, %s69
    %s87 = sphi 0, %s87
    %s89 = sphi 0, %s87
    %s90 = sphi 0, %s89
    %s104 = sphi 0, %s90
    %s108 = sphi 0, %s108
    %s110 = sphi 0, %s108
    %s111 = sphi 0, %s110
    %s125 = sphi 0, %s111
    %s131 = sphi 0, %s133
    %s134 = sphi 0, %s131
    %s135 = sphi 0, %s134
    %s151 = sphi 0, %s135
  $region4: #{conv_block_forward.1} parent=0 // loop_header_branch
    %14 = sbr.rel (%p12) target = $region8
  $region5: #{conv_block_forward.1} parent=0 // loop_body
    %s16 = ssub.s32 %s11, 1
    %s17 = ssub.s32 %s11, 2
    %s18 = sadd.s32 %s11, 1
    %s19 = ssub.s32 %s11, %s18
    %p20 = scmp.eq.s32.totalorder %s19, 0
    %s22 = sadd.s32 %s21, 1
    %s23 = scalar_select %p20, %s21, %s22
    %p26 = pneg %p20
    %p27 = scmp.eq.s32.totalorder %s11, 1
    %p28 = por %p26, %p27
    %p29 = scmp.ne.s32.totalorder %s21, %s24
    %p30 = scmp.eq.s32.totalorder %s11, 0
    %p31 = por %p29, %p30
    %p32 = scmp.ne.s32.totalorder %s21, %s24
    %p33 = scmp.eq.s32.totalorder %s16, 1
    %p34 = por %p32, %p33
    %p35 = scmp.ne.s32.totalorder %s24, %s25
    %p36 = scmp.eq.s32.totalorder %s16, 0
    %p37 = por %p35, %p36
    %p38 = scmp.ne.s32.totalorder %s24, %s25
    %p39 = scmp.eq.s32.totalorder %s17, 1
    %p40 = por %p38, %p39
    %p42 = scmp.ne.s32.totalorder %s25, %s41
    %p43 = scmp.eq.s32.totalorder %s17, 0
    %p44 = por %p42, %p43
    %s46 = sadd.s32 %s45, 1
    %p49 = scmp.eq.s32.totalorder %s11, 1
    %p50 = scmp.ne.s32.totalorder %s45, %s47
    %p51 = scmp.eq.s32.totalorder %s11, 0
    %p52 = por %p50, %p51
    %p53 = scmp.ne.s32.totalorder %s45, %s47
    %p54 = scmp.eq.s32.totalorder %s16, 1
    %p55 = por %p53, %p54
    %p56 = scmp.ne.s32.totalorder %s47, %s48
    %p57 = scmp.eq.s32.totalorder %s16, 0
    %p58 = por %p56, %p57
    %p59 = scmp.ne.s32.totalorder %s47, %s48
    %p60 = scmp.eq.s32.totalorder %s17, 1
    %p61 = por %p59, %p60
    %p63 = scmp.ne.s32.totalorder %s48, %s62
    %p64 = scmp.eq.s32.totalorder %s17, 0
    %p65 = por %p63, %p64
    %s67 = sadd.s32 %s66, 1
    %p70 = scmp.eq.s32.totalorder %s11, 1
    %p71 = scmp.ne.s32.totalorder %s66, %s68
    %p72 = scmp.eq.s32.totalorder %s11, 0
    %p73 = por %p71, %p72
    %p74 = scmp.ne.s32.totalorder %s66, %s68
    %p75 = scmp.eq.s32.totalorder %s16, 1
    %p76 = por %p74, %p75
    %p77 = scmp.ne.s32.totalorder %s68, %s69
    %p78 = scmp.eq.s32.totalorder %s16, 0
    %p79 = por %p77, %p78
    %p80 = scmp.ne.s32.totalorder %s68, %s69
    %p81 = scmp.eq.s32.totalorder %s17, 1
    %p82 = por %p80, %p81
    %p84 = scmp.ne.s32.totalorder %s69, %s83
    %p85 = scmp.eq.s32.totalorder %s17, 0
    %p86 = por %p84, %p85
    %s88 = sadd.s32 %s87, 1
    %p91 = scmp.eq.s32.totalorder %s11, 1
    %p92 = scmp.ne.s32.totalorder %s87, %s89
    %p93 = scmp.eq.s32.totalorder %s11, 0
    %p94 = por %p92, %p93
    %p95 = scmp.ne.s32.totalorder %s87, %s89
    %p96 = scmp.eq.s32.totalorder %s16, 1
    %p97 = por %p95, %p96
    %p98 = scmp.ne.s32.totalorder %s89, %s90
    %p99 = scmp.eq.s32.totalorder %s16, 0
    %p100 = por %p98, %p99
    %p101 = scmp.ne.s32.totalorder %s89, %s90
    %p102 = scmp.eq.s32.totalorder %s17, 1
    %p103 = por %p101, %p102
    %p105 = scmp.ne.s32.totalorder %s90, %s104
    %p106 = scmp.eq.s32.totalorder %s17, 0
    %p107 = por %p105, %p106
    %s109 = sadd.s32 %s108, 1
    %p112 = scmp.eq.s32.totalorder %s11, 1
    %p113 = scmp.ne.s32.totalorder %s108, %s110
    %p114 = scmp.eq.s32.totalorder %s11, 0
    %p115 = por %p113, %p114
    %p116 = scmp.ne.s32.totalorder %s108, %s110
    %p117 = scmp.eq.s32.totalorder %s16, 1
    %p118 = por %p116, %p117
    %p119 = scmp.ne.s32.totalorder %s110, %s111
    %p120 = scmp.eq.s32.totalorder %s16, 0
    %p121 = por %p119, %p120
    %p122 = scmp.ne.s32.totalorder %s110, %s111
    %p123 = scmp.eq.s32.totalorder %s17, 1
    %p124 = por %p122, %p123
    %p126 = scmp.ne.s32.totalorder %s111, %s125
    %p127 = scmp.eq.s32.totalorder %s17, 0
    %p128 = por %p126, %p127
    %s129 = ssub.s32 %s11, %s18
    %p130 = scmp.eq.s32.totalorder %s129, 0
    %s132 = sadd.s32 %s131, 1
    %s133 = scalar_select %p130, %s131, %s132
    %p136 = pneg %p130
    %p137 = scmp.eq.s32.totalorder %s11, 1
    %p138 = por %p136, %p137
    %p139 = scmp.ne.s32.totalorder %s131, %s134
    %p140 = scmp.eq.s32.totalorder %s11, 0
    %p141 = por %p139, %p140
    %p142 = scmp.ne.s32.totalorder %s131, %s134
    %p143 = scmp.eq.s32.totalorder %s16, 1
    %p144 = por %p142, %p143
    %p145 = scmp.ne.s32.totalorder %s134, %s135
    %p146 = scmp.eq.s32.totalorder %s16, 0
    %p147 = por %p145, %p146
    %p148 = scmp.ne.s32.totalorder %s134, %s135
    %p149 = scmp.eq.s32.totalorder %s17, 1
    %p150 = por %p148, %p149
    %p152 = scmp.ne.s32.totalorder %s135, %s151
    %p153 = scmp.eq.s32.totalorder %s17, 0
    %p154 = por %p152, %p153
    %p155 = scmp.le.s32.totalorder 1, %s11
    %p156 = scmp.lt.s32.totalorder %s11, 3
    %p157 = pnand %p155, %p156
    %p158 = pneg %p157
    // Predicated region
    $region9: #{conv_block_forward.1} parent=5 // pred_check
      _
    $region10: #{conv_block_forward.1} parent=5 // pred_check_branch
      %160 = sbr.rel (%p157) target = $region12
    $region11: #{conv_block_forward.1} parent=5 // pred_region
      %s161 = ssub.s32 %s11, 1
      // Predicated region
      $region13: #{conv_block_forward.1} parent=11 // pred_check
        %p162 = pneg %p58
      $region14: #{conv_block_forward.1} parent=11 // pred_check_branch
        %164 = sbr.rel (%p162) target = $region16
      $region15: #{conv_block_forward.1} parent=11 // pred_region
        _
      $region16: #{conv_block_forward.1} parent=11 // pred_fallthru
        _
      // Predicated region
      $region17: #{conv_block_forward.1} parent=11 // pred_check
        %p165 = pneg %p79
      $region18: #{conv_block_forward.1} parent=11 // pred_check_branch
        %167 = sbr.rel (%p165) target = $region20
      $region19: #{conv_block_forward.1} parent=11 // pred_region
        _
      $region20: #{conv_block_forward.1} parent=11 // pred_fallthru
        _
      // Predicated region
      $region21: #{conv_block_forward.1} parent=11 // pred_check
        %p168 = pneg %p100
      $region22: #{conv_block_forward.1} parent=11 // pred_check_branch
        %170 = sbr.rel (%p168) target = $region24
      $region23: #{conv_block_forward.1} parent=11 // pred_region
        _
      $region24: #{conv_block_forward.1} parent=11 // pred_fallthru
        _
      // Predicated region
      $region25: #{conv_block_forward.1} parent=11 // pred_check
        %p171 = pneg %p121
      $region26: #{conv_block_forward.1} parent=11 // pred_check_branch
        %173 = sbr.rel (%p171) target = $region28
      $region27: #{conv_block_forward.1} parent=11 // pred_region
        _
      $region28: #{conv_block_forward.1} parent=11 // pred_fallthru
        _
    $region12: #{conv_block_forward.1} parent=5 // pred_fallthru
      _
    %p174 = scmp.lt.s32.totalorder %s11, 2
    // Predicated region
    $region29: #{conv_block_forward.1} parent=5 // pred_check
      %p175 = pneg %p174
    $region30: #{conv_block_forward.1} parent=5 // pred_check_branch
      %177 = sbr.rel (%p175) target = $region32
    $region31: #{conv_block_forward.1} parent=5 // pred_region
      // Predicated region
      $region33: #{conv_block_forward.1} parent=31 // pred_check
        %p178 = pneg %p31
      $region34: #{conv_block_forward.1} parent=31 // pred_check_branch
        %180 = sbr.rel (%p178) target = $region36
      $region35: #{conv_block_forward.1} parent=31 // pred_region
        %p181 = scmp.lt.s32.totalorder %s11, 1
        %s182 = scalar_select %p181, %s11, 1
        %s183 = smul.addr %s182, 4
        %s184 = smul.addr %s183, 4
        %s185 = scalar_lea.vmem %s0, %s184
      $region36: #{conv_block_forward.1} parent=31 // pred_fallthru
        _
    $region32: #{conv_block_forward.1} parent=5 // pred_fallthru
      _
    %p186 = scmp.le.s32.totalorder 1, %s11
    %p187 = scmp.lt.s32.totalorder %s11, 3
    %p188 = pnand %p186, %p187
    %p189 = pneg %p188
    // Predicated region
    $region37: #{conv_block_forward.1} parent=5 // pred_check
      _
    $region38: #{conv_block_forward.1} parent=5 // pred_check_branch
      %191 = sbr.rel (%p188) target = $region40
    $region39: #{conv_block_forward.1} parent=5 // pred_region
      %s192 = ssub.s32 %s11, 1
      %p193 = scmp.lt.s32.totalorder %s16, 1
      %s194 = scalar_select %p193, %s16, 1
      %s195 = smul.addr %s194, 4
      %s196 = smul.addr %s195, 4
      %s197 = scalar_lea.vmem %s0, %s196
      %p198 = pneg %p37
      %p199 = pneg %p34
      %p200 = pneg %p58
      %p201 = pneg %p55
      %p202 = pneg %p79
      %p203 = pneg %p76
      %p204 = pneg %p100
      %p205 = pneg %p97
      %p206 = pneg %p121
      %p207 = pneg %p118
      %p208 = pneg %p147
      %p209 = pneg %p144
      %p210 = scmp.lt.s32.totalorder %s16, 1
      %s211 = scalar_select %p210, %s16, 1
      %s212 = smul.addr %s211, 2
      %s213 = smul.addr %s212, 8
      %s214 = scalar_lea.vmem %s5, %s213
      %p215 = scmp.lt.s32.totalorder %s16, 1
      %s216 = scalar_select %p215, %s16, 1
      %s217 = smul.addr %s216, 4
      %s218 = smul.addr %s217, 4
      %s219 = scalar_lea.vmem %s0, %s218
      %p220 = scmp.lt.s32.totalorder %s16, 1
      %s221 = scalar_select %p220, %s16, 1
      %s222 = smul.addr %s221, 2
      %s223 = smul.addr %s222, 8
      %s224 = scalar_lea.vmem %s5, %s223
      %v226 = vld [vmem:[%s219] sm:$0xff]
      %v227 = vld [vmem:[%s219 + $0x8] sm:$0xff]
      %v228 = vld [vmem:[%s1] sm:$0xf]
      %v229 = vld [vmem:[%s1 + $0x4] sm:$0xf]
      %v230 = vld [vmem:[%s1 + $0x8] sm:$0xf]
      %v231 = vld [vmem:[%s1 + $0xc] sm:$0xf]
      %v232 = vld [vmem:[%s1 + $0x10] sm:$0xf]
      %v233 = vld [vmem:[%s1 + $0x14] sm:$0xf]
      %v234 = vld [vmem:[%s1 + $0x18] sm:$0xf]
      %v235 = vld [vmem:[%s1 + $0x1c] sm:$0xf]
      %v236 = vld [vmem:[%s1 + $0x20] sm:$0xf]
      %v237 = vld [vmem:[%s1 + $0x24] sm:$0xf]
      %v238 = vld [vmem:[%s1 + $0x28] sm:$0xf]
      %v239 = vld [vmem:[%s1 + $0x2c] sm:$0xf]
      %v240 = vld [vmem:[%s1 + $0x30] sm:$0xf]
      %v241 = vld [vmem:[%s1 + $0x34] sm:$0xf]
      %v242 = vld [vmem:[%s1 + $0x38] sm:$0xf]
      %v243 = vld [vmem:[%s1 + $0x3c] sm:$0xf]
      %v244 = vld [vmem:[%s1 + $0x40] sm:$0xf]
      %v245 = vld [vmem:[%s1 + $0x44] sm:$0xf]
      %v246 = vld [vmem:[%s1 + $0x48] sm:$0xf]
      %v247 = vld [vmem:[%s1 + $0x4c] sm:$0xf]
      %v248 = vld [vmem:[%s1 + $0x50] sm:$0xf]
      %v249 = vld [vmem:[%s1 + $0x54] sm:$0xf]
      %v250 = vld [vmem:[%s1 + $0x58] sm:$0xf]
      %v251 = vld [vmem:[%s1 + $0x5c] sm:$0xf]
      %v252 = vld [vmem:[%s1 + $0x60] sm:$0xf]
      %v253 = vld [vmem:[%s1 + $0x64] sm:$0xf]
      %v254 = vld [vmem:[%s1 + $0x68] sm:$0xf]
      %v255 = vld [vmem:[%s1 + $0x6c] sm:$0xf]
      %v256 = vld [vmem:[%s2] sm:$0x1]
      %v258 = vlaneseq
      %v259 = vshrl.u32 %v258, 7
      %v260 = vsub.s32 0, %v259
      %v261 = vrot.slane %v256, %v260
      %v265 = vunpack.c.l.b16 %v226
      %v266 = vunpack.c.h.b16 %v226
      %v267 = vunpack.c.l.b16 %v227
      %v268 = vunpack.c.h.b16 %v227
      %v269 = vpack.c.b16 %v267, %v265
      %v270 = vpack.c.b16 %v268, %v266
      %v300 = vunpack.c.l.b16 %v228
      %v301 = vunpack.c.l.b16 %v229
      %v302 = vunpack.c.l.b16 %v230
      %v303 = vunpack.c.l.b16 %v231
      %v304 = vunpack.c.l.b16 %v232
      %v305 = vunpack.c.l.b16 %v233
      %v306 = vunpack.c.l.b16 %v234
      %v307 = vunpack.c.l.b16 %v235
      %v308 = vunpack.c.l.b16 %v236
      %v309 = vunpack.c.l.b16 %v237
      %v310 = vunpack.c.l.b16 %v238
      %v311 = vunpack.c.l.b16 %v239
      %v312 = vunpack.c.l.b16 %v240
      %v313 = vunpack.c.l.b16 %v241
      %v314 = vunpack.c.l.b16 %v242
      %v315 = vunpack.c.l.b16 %v243
      %v316 = vunpack.c.l.b16 %v244
      %v317 = vunpack.c.l.b16 %v245
      %v318 = vunpack.c.l.b16 %v246
      %v319 = vunpack.c.l.b16 %v247
      %v320 = vunpack.c.l.b16 %v248
      %v321 = vunpack.c.l.b16 %v249
      %v322 = vunpack.c.l.b16 %v250
      %v323 = vunpack.c.l.b16 %v251
      %v324 = vunpack.c.l.b16 %v252
      %v325 = vunpack.c.l.b16 %v253
      %v326 = vunpack.c.l.b16 %v254
      %v327 = vunpack.c.l.b16 %v255
      %v328 = vpack.c.b16 %v301, %v300
      %v329 = vpack.c.b16 %v303, %v302
      %v330 = vpack.c.b16 %v305, %v304
      %v331 = vpack.c.b16 %v307, %v306
      %v332 = vpack.c.b16 %v309, %v308
      %v333 = vpack.c.b16 %v311, %v310
      %v334 = vpack.c.b16 %v313, %v312
      %v335 = vpack.c.b16 %v315, %v314
      %v336 = vpack.c.b16 %v317, %v316
      %v337 = vpack.c.b16 %v319, %v318
      %v338 = vpack.c.b16 %v321, %v320
      %v339 = vpack.c.b16 %v323, %v322
      %v340 = vpack.c.b16 %v325, %v324
      %v341 = vpack.c.b16 %v327, %v326
      %vm356 = vcmask 785408
      %v358 = vsel %vm356, %v270, 0
      %360 = vmatprep.subr.bf16.mxu0 0
      %361 = vmatpush1.bf16.msra.mxu0 %v335
      %362 = vmatprep.subr.bf16.mxu0 0
      %363 = vmatpush1.bf16.msra.mxu0 %v334
      %364 = vmatprep.subr.bf16.mxu0 0
      %365 = vmatpush1.bf16.msra.mxu0 %v333
      %366 = vmatprep.subr.bf16.mxu0 0
      %367 = vmatpush1.bf16.msra.mxu0 %v332
      %368 = vmatprep.subr.bf16.mxu0 0
      %369 = vmatpush1.bf16.msra.mxu0 %v331
      %370 = vmatprep.subr.bf16.mxu0 0
      %371 = vmatpush1.bf16.msra.mxu0 %v330
      %372 = vmatprep.subr.bf16.mxu0 0
      %373 = vmatpush1.bf16.msra.mxu0 %v329
      %374 = vmatprep.subr.bf16.mxu0 0
      %375 = vmatpush1.bf16.msra.mxu0 %v328
      %376 = vmatprep.subr.bf16.mxu0 0
      %377 = vmatpush2.bf16.msra.mxu0 0
      %378 = vmatprep.subr.bf16.mxu0 0
      %379 = vmatpush2.bf16.msra.mxu0 0
      %380 = vmatprep.subr.bf16.mxu0 0
      %381 = vmatpush2.bf16.msra.mxu0 %v341
      %382 = vmatprep.subr.bf16.mxu0 0
      %383 = vmatpush2.bf16.msra.mxu0 %v340
      %384 = vmatprep.subr.bf16.mxu0 0
      %385 = vmatpush2.bf16.msra.mxu0 %v339
      %386 = vmatprep.subr.bf16.mxu0 0
      %387 = vmatpush2.bf16.msra.mxu0 %v338
      %388 = vmatprep.subr.bf16.mxu0 0
      %389 = vmatpush2.bf16.msra.mxu0 %v337
      %390 = vmatprep.subr.bf16.mxu0 0
      %391 = vmatpush2.bf16.msra.mxu0 %v336
      %392 = vmatprep.mubr.bf16.mxu0 %v358
      %393 = vmatmul.mubr.bf16.gmra.mxu0 %v269
      %v394 = vpop.f32.mrf.mxu0
      %v395 = vadd.f32 %v261, %v394
      %v396 = vpop.f32.mrf.mxu0
      %v397 = vpop.f32.mrf.mxu0
      %v398 = vadd.f32 %v261, %v397
      %v399 = vpop.f32.mrf.mxu0
      %400 = vdwg.mxu0
      %v401 = vmax.f32 %v395, 0.0
      %v402 = vmax.f32 %v398, 0.0
      %403 = vst [vmem:[#allocation2] sm:$0x1] 0.0
      %404 = vst [vmem:[#allocation2 + $0x11] sm:$0x1] 0.0
      %405 = vst [vmem:[#allocation2 + $0x1] sm:$0xff] %v401
      %406 = vst [vmem:[#allocation2 + $0x9] sm:$0xff] %v402
      %v407 = vld [vmem:[#allocation2] sm:$0xff]
      %v408 = vld [vmem:[#allocation2 + $0x8] sm:$0xff]
      %v409 = vpack.c.bf16 %v408, %v407
      %v410 = vld [vmem:[%s3] sm:$0xf]
      %v411 = vld [vmem:[%s3 + $0x4] sm:$0xf]
      %v412 = vld [vmem:[%s3 + $0x8] sm:$0xf]
      %v413 = vld [vmem:[%s3 + $0xc] sm:$0xf]
      %v414 = vld [vmem:[%s3 + $0x10] sm:$0xf]
      %v415 = vld [vmem:[%s3 + $0x14] sm:$0xf]
      %v416 = vld [vmem:[%s3 + $0x18] sm:$0xf]
      %v417 = vld [vmem:[%s3 + $0x1c] sm:$0xf]
      %v418 = vld [vmem:[%s3 + $0x20] sm:$0xf]
      %v419 = vld [vmem:[%s3 + $0x24] sm:$0xf]
      %v420 = vld [vmem:[%s3 + $0x28] sm:$0xf]
      %v421 = vld [vmem:[%s3 + $0x2c] sm:$0xf]
      %v422 = vld [vmem:[%s3 + $0x30] sm:$0xf]
      %v423 = vld [vmem:[%s3 + $0x34] sm:$0xf]
      %v424 = vld [vmem:[%s3 + $0x38] sm:$0xf]
      %v425 = vld [vmem:[%s3 + $0x3c] sm:$0xf]
      %v426 = vpack.c.bf16 %v402, %v401
      %s427 = scalar_lea.vmem %s3, 64
      %v428 = vld [vmem:[%s427] sm:$0xf]
      %v429 = vld [vmem:[%s427 + $0x4] sm:$0xf]
      %v430 = vld [vmem:[%s427 + $0x8] sm:$0xf]
      %v431 = vld [vmem:[%s427 + $0xc] sm:$0xf]
      %v432 = vld [vmem:[%s427 + $0x10] sm:$0xf]
      %v433 = vld [vmem:[%s427 + $0x14] sm:$0xf]
      %v434 = vld [vmem:[%s427 + $0x18] sm:$0xf]
      %v435 = vld [vmem:[%s427 + $0x1c] sm:$0xf]
      %v436 = vld [vmem:[%s427 + $0x20] sm:$0xf]
      %v437 = vld [vmem:[%s427 + $0x24] sm:$0xf]
      %v438 = vld [vmem:[%s427 + $0x28] sm:$0xf]
      %v439 = vld [vmem:[%s427 + $0x2c] sm:$0xf]
      %v440 = vld [vmem:[%s427 + $0x30] sm:$0xf]
      %v441 = vld [vmem:[%s427 + $0x34] sm:$0xf]
      %v442 = vld [vmem:[%s427 + $0x38] sm:$0xf]
      %v443 = vld [vmem:[%s427 + $0x3c] sm:$0xf]
      %v460 = vunpack.c.l.b16 %v428
      %v461 = vunpack.c.l.b16 %v429
      %v462 = vunpack.c.l.b16 %v430
      %v463 = vunpack.c.l.b16 %v431
      %v464 = vunpack.c.l.b16 %v432
      %v465 = vunpack.c.l.b16 %v433
      %v466 = vunpack.c.l.b16 %v434
      %v467 = vunpack.c.l.b16 %v435
      %v468 = vunpack.c.l.b16 %v436
      %v469 = vunpack.c.l.b16 %v437
      %v470 = vunpack.c.l.b16 %v438
      %v471 = vunpack.c.l.b16 %v439
      %v472 = vunpack.c.l.b16 %v440
      %v473 = vunpack.c.l.b16 %v441
      %v474 = vunpack.c.l.b16 %v442
      %v475 = vunpack.c.l.b16 %v443
      %v476 = vpack.c.b16 %v461, %v460
      %v477 = vpack.c.b16 %v463, %v462
      %v478 = vpack.c.b16 %v465, %v464
      %v479 = vpack.c.b16 %v467, %v466
      %v480 = vpack.c.b16 %v469, %v468
      %v481 = vpack.c.b16 %v471, %v470
      %v482 = vpack.c.b16 %v473, %v472
      %v483 = vpack.c.b16 %v475, %v474
      %492 = vmatprep.subr.bf16.mxu0 0
      %493 = vmatpush1.bf16.msra.mxu0 %v483
      %494 = vmatprep.subr.bf16.mxu0 0
      %495 = vmatpush1.bf16.msra.mxu0 %v482
      %496 = vmatprep.subr.bf16.mxu0 0
      %497 = vmatpush1.bf16.msra.mxu0 %v481
      %498 = vmatprep.subr.bf16.mxu0 0
      %499 = vmatpush1.bf16.msra.mxu0 %v480
      %500 = vmatprep.subr.bf16.mxu0 0
      %501 = vmatpush1.bf16.msra.mxu0 %v479
      %502 = vmatprep.subr.bf16.mxu0 0
      %503 = vmatpush1.bf16.msra.mxu0 %v478
      %504 = vmatprep.subr.bf16.mxu0 0
      %505 = vmatpush1.bf16.msra.mxu0 %v477
      %506 = vmatprep.subr.bf16.mxu0 0
      %507 = vmatpush1.bf16.msra.mxu0 %v476
      %508 = vmatprep.subr.bf16.mxu0 0
      %509 = vmatpush2.bf16.msra.mxu0 0
      %510 = vmatprep.subr.bf16.mxu0 0
      %511 = vmatpush2.bf16.msra.mxu0 0
      %512 = vmatprep.subr.bf16.mxu0 0
      %513 = vmatpush2.bf16.msra.mxu0 0
      %514 = vmatprep.subr.bf16.mxu0 0
      %515 = vmatpush2.bf16.msra.mxu0 0
      %516 = vmatprep.subr.bf16.mxu0 0
      %517 = vmatpush2.bf16.msra.mxu0 0
      %518 = vmatprep.subr.bf16.mxu0 0
      %519 = vmatpush2.bf16.msra.mxu0 0
      %520 = vmatprep.subr.bf16.mxu0 0
      %521 = vmatpush2.bf16.msra.mxu0 0
      %522 = vmatprep.subr.bf16.mxu0 0
      %523 = vmatpush2.bf16.msra.mxu0 0
      %524 = vmatprep.mubr.bf16.mxu0 0
      %525 = vmatmul.mubr.bf16.gmra.mxu0 %v426
      %v526 = vpop.f32.mrf.mxu0
      %v527 = vadd.f32 0.0, %v526
      %v528 = vpop.f32.mrf.mxu0
      %v529 = vpop.f32.mrf.mxu0
      %v530 = vadd.f32 0.0, %v529
      %v531 = vpop.f32.mrf.mxu0
      %532 = vdwg.mxu0
      %v549 = vunpack.c.l.b16 %v410
      %v550 = vunpack.c.l.b16 %v411
      %v551 = vunpack.c.l.b16 %v412
      %v552 = vunpack.c.l.b16 %v413
      %v553 = vunpack.c.l.b16 %v414
      %v554 = vunpack.c.l.b16 %v415
      %v555 = vunpack.c.l.b16 %v416
      %v556 = vunpack.c.l.b16 %v417
      %v557 = vunpack.c.l.b16 %v418
      %v558 = vunpack.c.l.b16 %v419
      %v559 = vunpack.c.l.b16 %v420
      %v560 = vunpack.c.l.b16 %v421
      %v561 = vunpack.c.l.b16 %v422
      %v562 = vunpack.c.l.b16 %v423
      %v563 = vunpack.c.l.b16 %v424
      %v564 = vunpack.c.l.b16 %v425
      %v565 = vpack.c.b16 %v550, %v549
      %v566 = vpack.c.b16 %v552, %v551
      %v567 = vpack.c.b16 %v554, %v553
      %v568 = vpack.c.b16 %v556, %v555
      %v569 = vpack.c.b16 %v558, %v557
      %v570 = vpack.c.b16 %v560, %v559
      %v571 = vpack.c.b16 %v562, %v561
      %v572 = vpack.c.b16 %v564, %v563
      %581 = vmatprep.subr.bf16.mxu0 0
      %582 = vmatpush1.bf16.msra.mxu0 %v572
      %583 = vmatprep.subr.bf16.mxu0 0
      %584 = vmatpush1.bf16.msra.mxu0 %v571
      %585 = vmatprep.subr.bf16.mxu0 0
      %586 = vmatpush1.bf16.msra.mxu0 %v570
      %587 = vmatprep.subr.bf16.mxu0 0
      %588 = vmatpush1.bf16.msra.mxu0 %v569
      %589 = vmatprep.subr.bf16.mxu0 0
      %590 = vmatpush1.bf16.msra.mxu0 %v568
      %591 = vmatprep.subr.bf16.mxu0 0
      %592 = vmatpush1.bf16.msra.mxu0 %v567
      %593 = vmatprep.subr.bf16.mxu0 0
      %594 = vmatpush1.bf16.msra.mxu0 %v566
      %595 = vmatprep.subr.bf16.mxu0 0
      %596 = vmatpush1.bf16.msra.mxu0 %v565
      %597 = vmatprep.subr.bf16.mxu0 0
      %598 = vmatpush2.bf16.msra.mxu0 0
      %599 = vmatprep.subr.bf16.mxu0 0
      %600 = vmatpush2.bf16.msra.mxu0 0
      %601 = vmatprep.subr.bf16.mxu0 0
      %602 = vmatpush2.bf16.msra.mxu0 0
      %603 = vmatprep.subr.bf16.mxu0 0
      %604 = vmatpush2.bf16.msra.mxu0 0
      %605 = vmatprep.subr.bf16.mxu0 0
      %606 = vmatpush2.bf16.msra.mxu0 0
      %607 = vmatprep.subr.bf16.mxu0 0
      %608 = vmatpush2.bf16.msra.mxu0 0
      %609 = vmatprep.subr.bf16.mxu0 0
      %610 = vmatpush2.bf16.msra.mxu0 0
      %611 = vmatprep.subr.bf16.mxu0 0
      %612 = vmatpush2.bf16.msra.mxu0 0
      %613 = vmatprep.mubr.bf16.mxu0 0
      %614 = vmatmul.mubr.bf16.gmra.mxu0 %v409
      %v615 = vpop.f32.mrf.mxu0
      %v616 = vadd.f32 %v527, %v615
      %v617 = vpop.f32.mrf.mxu0
      %v618 = vpop.f32.mrf.mxu0
      %v619 = vadd.f32 %v530, %v618
      %v620 = vpop.f32.mrf.mxu0
      %621 = vdwg.mxu0
      %v622 = vld [vmem:[#allocation2 + $0x2] sm:$0xff]
      %v623 = vld [vmem:[#allocation2 + $0xa] sm:$0xff]
      %v624 = vpack.c.bf16 %v623, %v622
      %s625 = scalar_lea.vmem %s3, 128
      %v626 = vld [vmem:[%s625] sm:$0xf]
      %v627 = vld [vmem:[%s625 + $0x4] sm:$0xf]
      %v628 = vld [vmem:[%s625 + $0x8] sm:$0xf]
      %v629 = vld [vmem:[%s625 + $0xc] sm:$0xf]
      %v630 = vld [vmem:[%s625 + $0x10] sm:$0xf]
      %v631 = vld [vmem:[%s625 + $0x14] sm:$0xf]
      %v632 = vld [vmem:[%s625 + $0x18] sm:$0xf]
      %v633 = vld [vmem:[%s625 + $0x1c] sm:$0xf]
      %v634 = vld [vmem:[%s625 + $0x20] sm:$0xf]
      %v635 = vld [vmem:[%s625 + $0x24] sm:$0xf]
      %v636 = vld [vmem:[%s625 + $0x28] sm:$0xf]
      %v637 = vld [vmem:[%s625 + $0x2c] sm:$0xf]
      %v638 = vld [vmem:[%s625 + $0x30] sm:$0xf]
      %v639 = vld [vmem:[%s625 + $0x34] sm:$0xf]
      %v640 = vld [vmem:[%s625 + $0x38] sm:$0xf]
      %v641 = vld [vmem:[%s625 + $0x3c] sm:$0xf]
      %v658 = vunpack.c.l.b16 %v626
      %v659 = vunpack.c.l.b16 %v627
      %v660 = vunpack.c.l.b16 %v628
      %v661 = vunpack.c.l.b16 %v629
      %v662 = vunpack.c.l.b16 %v630
      %v663 = vunpack.c.l.b16 %v631
      %v664 = vunpack.c.l.b16 %v632
      %v665 = vunpack.c.l.b16 %v633
      %v666 = vunpack.c.l.b16 %v634
      %v667 = vunpack.c.l.b16 %v635
      %v668 = vunpack.c.l.b16 %v636
      %v669 = vunpack.c.l.b16 %v637
      %v670 = vunpack.c.l.b16 %v638
      %v671 = vunpack.c.l.b16 %v639
      %v672 = vunpack.c.l.b16 %v640
      %v673 = vunpack.c.l.b16 %v641
      %v674 = vpack.c.b16 %v659, %v658
      %v675 = vpack.c.b16 %v661, %v660
      %v676 = vpack.c.b16 %v663, %v662
      %v677 = vpack.c.b16 %v665, %v664
      %v678 = vpack.c.b16 %v667, %v666
      %v679 = vpack.c.b16 %v669, %v668
      %v680 = vpack.c.b16 %v671, %v670
      %v681 = vpack.c.b16 %v673, %v672
      %690 = vmatprep.subr.bf16.mxu0 0
      %691 = vmatpush1.bf16.msra.mxu0 %v681
      %692 = vmatprep.subr.bf16.mxu0 0
      %693 = vmatpush1.bf16.msra.mxu0 %v680
      %694 = vmatprep.subr.bf16.mxu0 0
      %695 = vmatpush1.bf16.msra.mxu0 %v679
      %696 = vmatprep.subr.bf16.mxu0 0
      %697 = vmatpush1.bf16.msra.mxu0 %v678
      %698 = vmatprep.subr.bf16.mxu0 0
      %699 = vmatpush1.bf16.msra.mxu0 %v677
      %700 = vmatprep.subr.bf16.mxu0 0
      %701 = vmatpush1.bf16.msra.mxu0 %v676
      %702 = vmatprep.subr.bf16.mxu0 0
      %703 = vmatpush1.bf16.msra.mxu0 %v675
      %704 = vmatprep.subr.bf16.mxu0 0
      %705 = vmatpush1.bf16.msra.mxu0 %v674
      %706 = vmatprep.subr.bf16.mxu0 0
      %707 = vmatpush2.bf16.msra.mxu0 0
      %708 = vmatprep.subr.bf16.mxu0 0
      %709 = vmatpush2.bf16.msra.mxu0 0
      %710 = vmatprep.subr.bf16.mxu0 0
      %711 = vmatpush2.bf16.msra.mxu0 0
      %712 = vmatprep.subr.bf16.mxu0 0
      %713 = vmatpush2.bf16.msra.mxu0 0
      %714 = vmatprep.subr.bf16.mxu0 0
      %715 = vmatpush2.bf16.msra.mxu0 0
      %716 = vmatprep.subr.bf16.mxu0 0
      %717 = vmatpush2.bf16.msra.mxu0 0
      %718 = vmatprep.subr.bf16.mxu0 0
      %719 = vmatpush2.bf16.msra.mxu0 0
      %720 = vmatprep.subr.bf16.mxu0 0
      %721 = vmatpush2.bf16.msra.mxu0 0
      %722 = vmatprep.mubr.bf16.mxu0 0
      %723 = vmatmul.mubr.bf16.gmra.mxu0 %v624
      %v724 = vpop.f32.mrf.mxu0
      %v725 = vadd.f32 0.0, %v724
      %v726 = vpop.f32.mrf.mxu0
      %v727 = vpop.f32.mrf.mxu0
      %v728 = vadd.f32 0.0, %v727
      %v729 = vpop.f32.mrf.mxu0
      %730 = vdwg.mxu0
      %v731 = vadd.f32 %v616, %v725
      %v732 = vadd.f32 %v619, %v728
      %v733 = vld [vmem:[%s4] sm:$0x1]
      %v735 = vlaneseq
      %v736 = vshrl.u32 %v735, 7
      %v737 = vsub.s32 0, %v736
      %v738 = vrot.slane %v733, %v737
      %v740 = vadd.f32 %v731, %v738
      %v741 = vadd.f32 %v732, %v738
      %v742 = vmax.f32 %v740, 0.0
      %v743 = vmax.f32 %v741, 0.0
      %744 = vst [vmem:[%s224] sm:$0xff] %v742
      %745 = vst [vmem:[%s224 + $0x8] sm:$0xff] %v743
      %p746 = scmp.lt.s32.totalorder %s16, 1
      %s747 = scalar_select %p746, %s16, 1
      %s748 = smul.addr %s747, 2
      %s749 = smul.addr %s748, 8
      %s750 = scalar_lea.vmem %s5, %s749
      // Predicated region
      $region41: #{conv_block_forward.1} parent=39 // pred_check
        %p751 = pneg %p144
      $region42: #{conv_block_forward.1} parent=39 // pred_check_branch
        %753 = sbr.rel (%p751) target = $region44
      $region43: #{conv_block_forward.1} parent=39 // pred_region
        _
      $region44: #{conv_block_forward.1} parent=39 // pred_fallthru
        _
    $region40: #{conv_block_forward.1} parent=5 // pred_fallthru
      _
    %p754 = scmp.le.s32.totalorder 2, %s11
    // Predicated region
    $region45: #{conv_block_forward.1} parent=5 // pred_check
      %p755 = pneg %p754
    $region46: #{conv_block_forward.1} parent=5 // pred_check_branch
      %757 = sbr.rel (%p755) target = $region48
    $region47: #{conv_block_forward.1} parent=5 // pred_region
      %s758 = ssub.s32 %s11, 2
      // Predicated region
      $region49: #{conv_block_forward.1} parent=47 // pred_check
        %p759 = pneg %p150
      $region50: #{conv_block_forward.1} parent=47 // pred_check_branch
        %761 = sbr.rel (%p759) target = $region52
      $region51: #{conv_block_forward.1} parent=47 // pred_region
        %p762 = scmp.lt.s32.totalorder %s17, 1
        %s763 = scalar_select %p762, %s17, 1
        %s764 = smul.addr %s763, 2
        %s765 = smul.addr %s764, 8
        %s766 = scalar_lea.vmem %s5, %s765
      $region52: #{conv_block_forward.1} parent=47 // pred_fallthru
        _
    $region48: #{conv_block_forward.1} parent=5 // pred_fallthru
      _
  $region6: #{conv_block_forward.1} parent=0 // loop_footer
    %s15 = sadd.s32 1, %s11
  $region7: #{conv_block_forward.1} parent=0 // loop_footer_branch
    %10 = sbr.rel target = $region3
  $region8: #{conv_block_forward.1} parent=0 // loop_exit
    _

</llo_original>
